<compile_context>
chip_gen: v5e
topology: v5e:2x2
jax: 0.10.0
libtpu: 0.0.40
codegen_flags: <defaults>
</compile_context>

<pallas_src>
import math

import jax
import jax.numpy as jnp
from jax.experimental import pallas as pl
from jax.experimental.pallas import tpu as pltpu


# ----------------------------- kernels ------------------------------------- #

def linear_kernel_scratch_acc(x_ref, w_ref, b_ref, o_ref, acc_ref):
    """Low-precision output: accumulate in an f32 VMEM scratch, cast at the end.

    x_ref: (tm, tk)  w_ref: (tk, tn)  b_ref: (1, tn)  o_ref: (tm, tn)
    acc_ref: (tm, tn) f32, persistent across the K grid axis.
    """
    @pl.when(pl.program_id(2) == 0)
    def _zero():
        acc_ref[...] = jnp.zeros_like(acc_ref)

    acc_ref[...] += jnp.dot(
        x_ref[...], w_ref[...], preferred_element_type=jnp.float32
    )

    @pl.when(pl.program_id(2) == pl.num_programs(2) - 1)
    def _finalize():
        # Bias is added exactly once, in f32, at the last K step.
        o_ref[...] = (acc_ref[...] + b_ref[...].astype(jnp.float32)).astype(
            o_ref.dtype
        )


def linear_kernel_inplace_acc(x_ref, w_ref, b_ref, o_ref):
    """f32 output: accumulate directly into the resident output tile (no scratch)."""
    @pl.when(pl.program_id(2) == 0)
    def _zero():
        o_ref[...] = jnp.zeros_like(o_ref)

    o_ref[...] += jnp.dot(
        x_ref[...], w_ref[...], preferred_element_type=jnp.float32
    )

    @pl.when(pl.program_id(2) == pl.num_programs(2) - 1)
    def _bias():
        o_ref[...] += b_ref[...].astype(o_ref.dtype)


# ----------------------------- helpers -------------------------------------- #

def _round_up(x, m):
    return ((x + m - 1) // m) * m


def _vmem_limit_bytes():
    """Per-chip scoped-VMEM budget: ~3/4 of physical, capped at 100 MiB."""
    try:
        cap = int(pltpu.get_tpu_info().vmem_capacity_bytes)
    except Exception:  # conservative fallback if the query is unavailable
        cap = 64 * 1024 * 1024
    return max(32 * 1024 * 1024, min(cap * 3 // 4, 100 * 1024 * 1024))


def _split_dim(dim, pref, align):
    """Pick (tile, padded_dim): tile is a multiple of `align`, close to `pref`,
    minimizing zero-padding; padded_dim = n_blocks * tile >= dim."""
    dim_aligned = _round_up(dim, align)
    n_blocks = max(1, -(-dim_aligned // pref))          # cdiv
    tile = _round_up(-(-dim_aligned // n_blocks), align)
    return tile, n_blocks * tile


def _pick_tiles(M, N, K, dtype):
    """MXU-aligned tiles sized to stay well inside the per-chip VMEM budget while
    maximizing arithmetic intensity (HBM re-fetch ~ MKN/tn + MKN/tm)."""
    if jnp.dtype(dtype).itemsize <= 2:       # bf16 / fp8 operands
        tm_pref, tn_pref, tk_pref = 1024, 1024, 512
    else:                                    # f32 operands
        tm_pref, tn_pref, tk_pref = 512, 1024, 512
    tm, Mp = _split_dim(M, tm_pref, 8)
    tn, Np = _split_dim(N, tn_pref, 128)
    tk, Kp = _split_dim(K, tk_pref, 128)

    # v7x has 2 TensorCores sharded over the "parallel" axes; avoid a (1,1,K)
    # grid when possible so neither core sits idle (no-op on v5e/v6e).
    if (Mp // tm) * (Np // tn) == 1 and tn >= 256 and tn % 256 == 0:
        tn //= 2

    return tm, tn, tk, Mp, Np, Kp


# ----------------------------- wrapper --------------------------------------- #

def pallas_linear(x, weight_t, bias, *, out_dtype=None):
    """x: (M, K); weight_t: (K, N) (pre-transposed nn.Linear weight); bias: (N,).

    Returns (M, N) = x @ weight_t + bias, accumulated in f32 on the MXU.
    """
    M, K = x.shape
    K2, N = weight_t.shape
    assert K == K2, (K, K2)
    assert bias.shape == (N,), bias.shape
    out_dtype = jnp.dtype(out_dtype or x.dtype)

    tm, tn, tk, Mp, Np, Kp = _pick_tiles(M, N, K, x.dtype)

    # Zero-pad up to the tiled extents: zero rows/cols do not change the valid
    # output region, and a lane-dense (multiple-of-128) N avoids masked stores.
    if (Mp, Kp) != (M, K):
        x = jnp.pad(x, ((0, Mp - M), (0, Kp - K)))
    if (Kp, Np) != (K, N):
        weight_t = jnp.pad(weight_t, ((0, Kp - K), (0, Np - N)))
    b2d = jnp.pad(bias, (0, Np - N)).reshape(1, Np)

    grid = (Mp // tm, Np // tn, Kp // tk)
    gm, gn, gk = grid

    f32_out = out_dtype == jnp.dtype(jnp.float32)
    kernel = linear_kernel_inplace_acc if f32_out else linear_kernel_scratch_acc
    scratch = [] if f32_out else [pltpu.VMEM((tm, tn), jnp.float32)]

    in_isz = jnp.dtype(x.dtype).itemsize
    out_isz = out_dtype.itemsize
    cost = pl.CostEstimate(
        flops=2 * Mp * Np * Kp,
        transcendentals=0,
        # Actual re-fetch traffic: x read once per N-tile, W once per M-tile.
        bytes_accessed=(Mp * Kp * gn + Kp * Np * gm) * in_isz
        + (Mp * Np + Np) * out_isz,
    )

    # TODO(synk): sweep pipeline_mode=pl.Buffered(3) on the x/weight specs if
    # profiling shows exposed DMA at small K step counts (mainly v7x).
    out = pl.pallas_call(
        kernel,
        out_shape=jax.ShapeDtypeStruct((Mp, Np), out_dtype),
        grid_spec=pltpu.PrefetchScalarGridSpec(
            num_scalar_prefetch=0,
            grid=grid,
            in_specs=[
                pl.BlockSpec((tm, tk), lambda i, j, k: (i, k)),   # x tile
                pl.BlockSpec((tk, tn), lambda i, j, k: (k, j)),   # weight tile
                pl.BlockSpec((1, tn), lambda i, j, k: (0, j)),    # bias tile
            ],
            out_specs=pl.BlockSpec((tm, tn), lambda i, j, k: (i, j)),
            scratch_shapes=scratch,
        ),
        compiler_params=pltpu.CompilerParams(
            dimension_semantics=("parallel", "parallel", "arbitrary"),
            vmem_limit_bytes=_vmem_limit_bytes(),
        ),
        cost_estimate=cost,
    )(x, weight_t, b2d)

    if (Mp, Np) != (M, N):
        out = out[:M, :N]
    return out


def init_linear_params(key, in_c, out_c, gain=1.0, dtype=jnp.float32):
    """Matches nn.init.xavier_uniform_(weight, gain=sqrt(gain)); bias = 0.

    The weight is generated / stored directly in the pre-transposed layout
    (in_c, out_c) so the kernel never pays a per-call HBM transpose
    (xavier_uniform_ is symmetric i.i.d. uniform, so the transposed shape is
    statistically identical; the bound depends only on fan_in + fan_out).
    Bias is kept in f32 regardless of `dtype` (it is tiny and added in f32).
    """
    bound = math.sqrt(gain) * math.sqrt(6.0 / (in_c + out_c))
    weight_t = jax.random.uniform(
        key, (in_c, out_c), dtype=dtype, minval=-bound, maxval=bound
    )
    bias = jnp.zeros((out_c,), dtype=jnp.float32)
    return weight_t, bias


if __name__ == "__main__":
    key = jax.random.PRNGKey(0)
    k_w, k_x = jax.random.split(key)

    batch, in_c, out_c = 8, 32, 64

    # --- f32 path (matches the PyTorch module's default dtype) ---
    weight_t, bias = init_linear_params(k_w, in_c, out_c, gain=1.0,
                                        dtype=jnp.float32)
    x = jax.random.normal(k_x, (batch, in_c), dtype=jnp.float32)

    out = jax.block_until_ready(pallas_linear(x, weight_t, bias))
    ref = jnp.dot(x, weight_t, precision=jax.lax.Precision.HIGHEST) + bias
    assert out.shape == (batch, out_c), out.shape
    # Tolerance covers TPU MXU default-precision f32 matmul (bf16 passes).
    assert jnp.allclose(out, ref, atol=5e-2, rtol=5e-2), float(
        jnp.max(jnp.abs(out - ref))
    )

    # --- bf16-operand path (preferred for perf: native MXU rate, half the HBM
    # bytes; accumulation stays in f32) ---
    x_bf = x.astype(jnp.bfloat16)
    w_bf = weight_t.astype(jnp.bfloat16)
    out_bf = jax.block_until_ready(pallas_linear(x_bf, w_bf, bias))
    ref_bf = (
        jnp.dot(x_bf.astype(jnp.float32), w_bf.astype(jnp.float32),
                precision=jax.lax.Precision.HIGHEST)
        + bias
    )
    assert out_bf.shape == (batch, out_c), out_bf.shape
    assert jnp.allclose(out_bf.astype(jnp.float32), ref_bf, atol=5e-2, rtol=5e-2)

    print("KERNEL_OK")
</pallas_src>

<mosaic_0001>
module attributes {stable_mosaic.version = 11 : i64} {
  func.func @linear_kernel_inplace_acc(%arg0: i32, %arg1: i32, %arg2: i32, %arg3: memref<8x128xf32, #tpu.memory_space<vmem>>, %arg4: memref<128x128xf32, #tpu.memory_space<vmem>>, %arg5: memref<1x128xf32, #tpu.memory_space<vmem>>, %arg6: memref<8x128xf32, #tpu.memory_space<vmem>>) attributes {dimension_semantics = [#tpu.dimension_semantics<parallel>, #tpu.dimension_semantics<parallel>, #tpu.dimension_semantics<arbitrary>], iteration_bounds = array<i64: 1, 1, 1>, scalar_prefetch = 0 : i64, scratch_operands = 0 : i64, tpu.core_type = #tpu.core_type<tc>, window_params = [{transform_indices = @transform_0, window_bounds = array<i64: 8, 128>}, {transform_indices = @transform_1, window_bounds = array<i64: 128, 128>}, {transform_indices = @transform_2, window_bounds = array<i64: 1, 128>}, {transform_indices = @transform_3, window_bounds = array<i64: 8, 128>}]} {
    %c0_i32 = arith.constant 0 : i32
    %0 = arith.cmpi eq, %arg2, %c0_i32 : i32
    %1 = arith.extui %0 : i1 to i32
    %c0_i32_0 = arith.constant 0 : i32
    %2 = arith.cmpi ne, %1, %c0_i32_0 : i32
    scf.if %2 {
      %cst_10 = arith.constant 0.000000e+00 : f32
      %12 = vector.broadcast %cst_10 : f32 to vector<8x128xf32>
      %c0_11 = arith.constant 0 : index
      %c0_12 = arith.constant 0 : index
      %13 = vector.load %arg6[%c0_11, %c0_12] : memref<8x128xf32, #tpu.memory_space<vmem>>, vector<8x128xf32>
      tpu.vector_store %arg6[%c0_11, %c0_12], %12 {strides = array<i32>} : memref<8x128xf32, #tpu.memory_space<vmem>>, vector<8x128xf32>,
    } else {
    }
    %c0 = arith.constant 0 : index
    %c0_1 = arith.constant 0 : index
    %3 = vector.load %arg6[%c0, %c0_1] : memref<8x128xf32, #tpu.memory_space<vmem>>, vector<8x128xf32>
    %c0_2 = arith.constant 0 : index
    %c0_3 = arith.constant 0 : index
    %4 = vector.load %arg3[%c0_2, %c0_3] : memref<8x128xf32, #tpu.memory_space<vmem>>, vector<8x128xf32>
    %c0_4 = arith.constant 0 : index
    %c0_5 = arith.constant 0 : index
    %5 = vector.load %arg4[%c0_4, %c0_5] : memref<128x128xf32, #tpu.memory_space<vmem>>, vector<128x128xf32>
    %cst = arith.constant dense<0.000000e+00> : vector<8x128xf32>
    %6 = tpu.matmul %4, %5, %cst {dimension_numbers = #tpu.dot_dimension_numbers<[1], [0], [0], [1], [0, 0, 1, 1], [], []>} : vector<8x128xf32>, vector<128x128xf32>, vector<8x128xf32> -> vector<8x128xf32>
    %7 = arith.addf %3, %6 : vector<8x128xf32>
    %c0_6 = arith.constant 0 : index
    %c0_7 = arith.constant 0 : index
    %8 = vector.load %arg6[%c0_6, %c0_7] : memref<8x128xf32, #tpu.memory_space<vmem>>, vector<8x128xf32>
    tpu.vector_store %arg6[%c0_6, %c0_7], %7 {strides = array<i32>} : memref<8x128xf32, #tpu.memory_space<vmem>>, vector<8x128xf32>,
    %c0_i32_8 = arith.constant 0 : i32
    %9 = arith.cmpi eq, %arg2, %c0_i32_8 : i32
    %10 = arith.extui %9 : i1 to i32
    %c0_i32_9 = arith.constant 0 : i32
    %11 = arith.cmpi ne, %10, %c0_i32_9 : i32
    scf.if %11 {
      %c0_10 = arith.constant 0 : index
      %c0_11 = arith.constant 0 : index
      %12 = vector.load %arg6[%c0_10, %c0_11] : memref<8x128xf32, #tpu.memory_space<vmem>>, vector<8x128xf32>
      %c0_12 = arith.constant 0 : index
      %c0_13 = arith.constant 0 : index
      %13 = vector.load %arg5[%c0_12, %c0_13] : memref<1x128xf32, #tpu.memory_space<vmem>>, vector<1x128xf32>
      %14 = vector.broadcast %13 : vector<1x128xf32> to vector<8x128xf32>
      %15 = arith.addf %12, %14 : vector<8x128xf32>
      %c0_14 = arith.constant 0 : index
      %c0_15 = arith.constant 0 : index
      %16 = vector.load %arg6[%c0_14, %c0_15] : memref<8x128xf32, #tpu.memory_space<vmem>>, vector<8x128xf32>
      tpu.vector_store %arg6[%c0_14, %c0_15], %15 {strides = array<i32>} : memref<8x128xf32, #tpu.memory_space<vmem>>, vector<8x128xf32>,
    } else {
    }
    return
  }
  func.func @transform_0(%arg0: i32, %arg1: i32, %arg2: i32) -> (i32, i32) {
    %c0_i32 = arith.constant 0 : i32
    return %arg0, %arg2 : i32, i32
  }
  func.func @transform_1(%arg0: i32, %arg1: i32, %arg2: i32) -> (i32, i32) {
    %c0_i32 = arith.constant 0 : i32
    return %arg2, %arg1 : i32, i32
  }
  func.func @transform_2(%arg0: i32, %arg1: i32, %arg2: i32) -> (i32, i32) {
    %c0_i32 = arith.constant 0 : i32
    %c0_i32_0 = arith.constant 0 : i32
    return %c0_i32, %arg1 : i32, i32
  }
  func.func @transform_3(%arg0: i32, %arg1: i32, %arg2: i32) -> (i32, i32) {
    %c0_i32 = arith.constant 0 : i32
    return %arg0, %arg1 : i32, i32
  }
}

</mosaic_0001>

<llo_original>
// kernel: tpu_custom_call.1
$region0: #{tpu_custom_call.1}
  #allocation0 [shape = 'u32[]', space=smem, size = 0x4, offset = 0x4, fixed_abs, tag = 'smem constant byte address 0x4 - core index']
  #allocation1 [shape = 'u32[72,128]{1,0:T(1,128)}', space=vmem, size = 0x9000, scoped, tag = 'internal scratch']
  %s0 = inlined_call_operand.hbm [shape: f32[8,128], index: 0, kind: input, shape index: {}]
  %s1 = inlined_call_operand.hbm [shape: f32[128,128], index: 1, kind: input, shape index: {}]
  %s2 = inlined_call_operand.vmem [shape: f32[1,128], index: 2, kind: input, shape index: {}]
  %s3 = inlined_call_operand.hbm [shape: f32[8,128], index: 3, kind: output, shape index: {}]
  %s4 = sld [smem:[#allocation0]]
  $region38: #{tpu_custom_call.1} parent=0
    _
  %s6 = ssub.s32 1, %s4
  %s7 = scalar_select 0, %s6, %s4
  $region1: #{tpu_custom_call.1} parent=0
    #allocation2 [shape = 'u8[4096]{0}', space=vmem, size = 0x1000, scoped, tag = 'input window, operand 0, single buffered']
    #allocation3 [shape = 's32[1]{0}', space=sflag, size = 0x4, scoped, tag = 'scoped memory for tpu_custom_call.1']
    #allocation4 [shape = 's32[1]{0}', space=sflag, size = 0x4, scoped, tag = 'scoped memory for tpu_custom_call.1']
    #allocation5 [shape = 'u8[65536]{0}', space=vmem, size = 0x10000, scoped, tag = 'input window, operand 1, single buffered']
    #allocation6 [shape = 's32[1]{0}', space=sflag, size = 0x4, scoped, tag = 'scoped memory for tpu_custom_call.1']
    #allocation7 [shape = 'u8[4096]{0}', space=vmem, size = 0x1000, scoped, tag = 'output window, operand 0, single buffered']
    %8 = vsyncpa [#allocation3], 0
    %9 = vsyncpa [#allocation6], 0
    %10 = vsyncpa [#allocation4], 0
    // Predicated region
    $region2: #{tpu_custom_call.1} parent=1 // pred_check
      _
    $region3: #{tpu_custom_call.1} parent=1 // pred_check_branch
      %12 = sbr.rel (0) target = $region5
    $region4: #{tpu_custom_call.1} parent=1 // pred_region
      %14 = vsyncadd [#allocation3], 0
      %s16 = sshll.u32 %s0, 4
      %s17 = int_to_ptr.hbm [resolvable:$true] %s16
      %s18 = sshll.u32 [#allocation2], 4
      %s19 = int_to_ptr.vmem [resolvable:$true] %s18
      %21 = dma.hbm_to_vmem [thread:$0]  %s17, 128, %s19, [#allocation3]
    $region5: #{tpu_custom_call.1} parent=1 // pred_fallthru
      _
    // Predicated region
    $region6: #{tpu_custom_call.1} parent=1 // pred_check
      _
    $region7: #{tpu_custom_call.1} parent=1 // pred_check_branch
      %23 = sbr.rel (0) target = $region9
    $region8: #{tpu_custom_call.1} parent=1 // pred_region
      %25 = vsyncadd [#allocation6], 0
      %s26 = sshll.u32 %s1, 4
      %s27 = int_to_ptr.hbm [resolvable:$true] %s26
      %s28 = sshll.u32 [#allocation5], 4
      %s29 = int_to_ptr.vmem [resolvable:$true] %s28
      %34 = dma.hbm_to_vmem [thread:$0]  %s27, 2048, %s29, [#allocation6], 128, 128, 8
    $region9: #{tpu_custom_call.1} parent=1 // pred_fallthru
      _
    // Predicated region
    $region10: #{tpu_custom_call.1} parent=1 // pred_check
      _
    $region11: #{tpu_custom_call.1} parent=1 // pred_check_branch
      %36 = sbr.rel (0) target = $region13
    $region12: #{tpu_custom_call.1} parent=1 // pred_region
      _
    $region13: #{tpu_custom_call.1} parent=1 // pred_fallthru
      _
    // Predicated region
    $region14: #{tpu_custom_call.1} parent=1 // pred_check
      _
    $region15: #{tpu_custom_call.1} parent=1 // pred_check_branch
      %38 = sbr.rel (0) target = $region17
    $region16: #{tpu_custom_call.1} parent=1 // pred_region
      %40 = dma.done [#allocation3], 128
    $region17: #{tpu_custom_call.1} parent=1 // pred_fallthru
      _
    // Predicated region
    $region18: #{tpu_custom_call.1} parent=1 // pred_check
      _
    $region19: #{tpu_custom_call.1} parent=1 // pred_check_branch
      %42 = sbr.rel (0) target = $region21
    $region20: #{tpu_custom_call.1} parent=1 // pred_region
      %44 = dma.done [#allocation6], 2048
    $region21: #{tpu_custom_call.1} parent=1 // pred_fallthru
      _
    %p45 = scmp.eq.s32.totalorder 0, 0
    // Predicated region
    $region22: #{tpu_custom_call.1} parent=1 // pred_check
      %p46 = pneg %p45
    $region23: #{tpu_custom_call.1} parent=1 // pred_check_branch
      %48 = sbr.rel (%p46) target = $region25
    $region24: #{tpu_custom_call.1} parent=1 // pred_region
      %49 = vst [vmem:[#allocation7] sm:$0xff] 0.0
    $region25: #{tpu_custom_call.1} parent=1 // pred_fallthru
      _
    %v50 = vld [vmem:[#allocation7] sm:$0xff]
    %v51 = vld [vmem:[#allocation2] sm:$0xff]
    %v52 = vld [vmem:[#allocation5] sm:$0xff]
    %v53 = vld [vmem:[#allocation5 + $0x8] sm:$0xff]
    %v54 = vld [vmem:[#allocation5 + $0x10] sm:$0xff]
    %v55 = vld [vmem:[#allocation5 + $0x18] sm:$0xff]
    %v56 = vld [vmem:[#allocation5 + $0x20] sm:$0xff]
    %v57 = vld [vmem:[#allocation5 + $0x28] sm:$0xff]
    %v58 = vld [vmem:[#allocation5 + $0x30] sm:$0xff]
    %v59 = vld [vmem:[#allocation5 + $0x38] sm:$0xff]
    %v60 = vld [vmem:[#allocation5 + $0x40] sm:$0xff]
    %v61 = vld [vmem:[#allocation5 + $0x48] sm:$0xff]
    %v62 = vld [vmem:[#allocation5 + $0x50] sm:$0xff]
    %v63 = vld [vmem:[#allocation5 + $0x58] sm:$0xff]
    %v64 = vld [vmem:[#allocation5 + $0x60] sm:$0xff]
    %v65 = vld [vmem:[#allocation5 + $0x68] sm:$0xff]
    %v66 = vld [vmem:[#allocation5 + $0x70] sm:$0xff]
    %v67 = vld [vmem:[#allocation5 + $0x78] sm:$0xff]
    %68 = vmatpush.msra.mxu0 %v67
    %69 = vmatpush.msra.mxu0 %v66
    %70 = vmatpush.msra.mxu0 %v65
    %71 = vmatpush.msra.mxu0 %v64
    %72 = vmatpush.msra.mxu0 %v63
    %73 = vmatpush.msra.mxu0 %v62
    %74 = vmatpush.msra.mxu0 %v61
    %75 = vmatpush.msra.mxu0 %v60
    %76 = vmatpush.msra.mxu0 %v59
    %77 = vmatpush.msra.mxu0 %v58
    %78 = vmatpush.msra.mxu0 %v57
    %79 = vmatpush.msra.mxu0 %v56
    %80 = vmatpush.msra.mxu0 %v55
    %81 = vmatpush.msra.mxu0 %v54
    %82 = vmatpush.msra.mxu0 %v53
    %83 = vmatpush.msra.mxu0 %v52
    %84 = vmatmul.f32.gmra.mxu0 %v51
    %v85 = vpop.f32.mrf.mxu0
    %v86 = vadd.f32 0.0, %v85
    %87 = vdwg.mxu0
    %v88 = vadd.f32 %v50, %v86
    %89 = vst [vmem:[#allocation7] sm:$0xff] %v88
    // Predicated region
    $region26: #{tpu_custom_call.1} parent=1 // pred_check
      %p90 = pneg %p45
    $region27: #{tpu_custom_call.1} parent=1 // pred_check_branch
      %92 = sbr.rel (%p90) target = $region29
    $region28: #{tpu_custom_call.1} parent=1 // pred_region
      %v93 = vld [vmem:[#allocation7] sm:$0xff]
      %v94 = vld [vmem:[%s2] sm:$0x1]
      %v96 = vperm.slane %v94, 0
      %v98 = vadd.f32 %v93, %v96
      %99 = vst [vmem:[#allocation7] sm:$0xff] %v98
    $region29: #{tpu_custom_call.1} parent=1 // pred_fallthru
      _
    // Predicated region
    $region30: #{tpu_custom_call.1} parent=1 // pred_check
      _
    $region31: #{tpu_custom_call.1} parent=1 // pred_check_branch
      %101 = sbr.rel (0) target = $region33
    $region32: #{tpu_custom_call.1} parent=1 // pred_region
      %103 = vsyncadd [#allocation4], 0
      %s105 = sshll.u32 [#allocation7], 4
      %s106 = int_to_ptr.vmem [resolvable:$true] %s105
      %s107 = sshll.u32 %s3, 4
      %s108 = int_to_ptr.hbm [resolvable:$true] %s107
      %110 = dma.vmem_to_hbm [thread:$0]  %s106, 128, %s108, [#allocation4]
    $region33: #{tpu_custom_call.1} parent=1 // pred_fallthru
      _
    // Predicated region
    $region34: #{tpu_custom_call.1} parent=1 // pred_check
      _
    $region35: #{tpu_custom_call.1} parent=1 // pred_check_branch
      %112 = sbr.rel (0) target = $region37
    $region36: #{tpu_custom_call.1} parent=1 // pred_region
      %114 = dma.done [#allocation4], 128
    $region37: #{tpu_custom_call.1} parent=1 // pred_fallthru
      _
    %115 = vsyncpa [#allocation3], 1
    %116 = vsyncpa [#allocation6], 1
    %117 = vsyncpa [#allocation4], 1

</llo_original>
